<compile_context>
chip_gen: v7x
topology: tpu7x:2x2x1
jax: 0.10.0
libtpu: 0.0.40
codegen_flags: <defaults>
</compile_context>

<pallas_src>
import math

import jax
import jax.numpy as jnp
from jax.experimental import pallas as pl
from jax.experimental.pallas import tpu as pltpu


def _round_up(x, m):
    return ((x + m - 1) // m) * m


def _vmem_budget_bytes():
    """Generation-aware (tile budget, vmem_limit) in bytes."""
    cap = 64 * 1024 * 1024  # conservative default: v7x per-TC VMEM
    try:
        info = pltpu.get_tpu_info()
        cap = int(getattr(info, "vmem_capacity_bytes", cap))
    except Exception:
        pass
    cap = max(32 * 1024 * 1024, min(cap, 128 * 1024 * 1024))
    limit = max(int(cap * 0.75), cap - 16 * 1024 * 1024)   # headroom for Mosaic scratch
    budget = int(limit * 0.9)
    return budget, limit


# ---------------------------------------------------------------------------
# Fast path: W (and bias) fully VMEM-resident, grid over row tiles only.
# ---------------------------------------------------------------------------
def _fc_kernel_bias(x_ref, w_ref, b_ref, o_ref):
    y = jnp.dot(x_ref[...], w_ref[...], preferred_element_type=jnp.float32)
    # Bias is added AFTER the activation, as in the PyTorch module.
    o_ref[...] = (jnp.maximum(y, 0.0) + b_ref[...]).astype(o_ref.dtype)


def _fc_kernel_nobias(x_ref, w_ref, o_ref):
    y = jnp.dot(x_ref[...], w_ref[...], preferred_element_type=jnp.float32)
    o_ref[...] = jnp.maximum(y, 0.0).astype(o_ref.dtype)


# ---------------------------------------------------------------------------
# Fallback: K-tiled reduction grid for layers where W does not fit in VMEM.
# ---------------------------------------------------------------------------
def _fc_ktiled_kernel_bias(x_ref, w_ref, b_ref, o_ref, acc_ref):
    k = pl.program_id(1)

    @pl.when(k == 0)
    def _():
        acc_ref[...] = jnp.zeros_like(acc_ref)

    acc_ref[...] += jnp.dot(x_ref[...], w_ref[...],
                            preferred_element_type=jnp.float32)

    @pl.when(k == pl.num_programs(1) - 1)
    def _():
        o_ref[...] = (jnp.maximum(acc_ref[...], 0.0) + b_ref[...]).astype(o_ref.dtype)


def _fc_ktiled_kernel_nobias(x_ref, w_ref, o_ref, acc_ref):
    k = pl.program_id(1)

    @pl.when(k == 0)
    def _():
        acc_ref[...] = jnp.zeros_like(acc_ref)

    acc_ref[...] += jnp.dot(x_ref[...], w_ref[...],
                            preferred_element_type=jnp.float32)

    @pl.when(k == pl.num_programs(1) - 1)
    def _():
        o_ref[...] = jnp.maximum(acc_ref[...], 0.0).astype(o_ref.dtype)


def fc_forward_single(x, w, b, *, use_bias, tm=4096, compute_dtype=None,
                      force_ktiled=False):
    """relu(x @ w) (+ b) for one stream as a Pallas TPU kernel."""
    M, K = x.shape
    Kw, N = w.shape
    assert Kw == K, "weight rows must match input feature dim"
    out_dtype = x.dtype
    out_bytes = jnp.dtype(out_dtype).itemsize

    if compute_dtype is not None:
        # Optional: halves x/W HBM traffic and doubles MXU rate; deviates from
        # strict f32 module numerics, so off by default.
        x = x.astype(compute_dtype)
        w = w.astype(compute_dtype)
    op_bytes = jnp.dtype(x.dtype).itemsize

    budget, vmem_limit = _vmem_budget_bytes()

    # (8,128)-tile-aware VMEM footprints; Mosaic double-buffers each BlockSpec.
    w_bytes = _round_up(K, 8) * _round_up(N, 128) * op_bytes
    b_bytes = 8 * _round_up(N, 128) * 4 if use_bias else 0
    resident2 = 2 * (w_bytes + b_bytes)
    per_row2 = 2 * (_round_up(K, 128) * op_bytes + _round_up(N, 128) * out_bytes)

    use_resident = (resident2 <= budget // 2) and not force_ktiled

    if use_resident:
        # ---- fast path: whole W (and bias) stay VMEM-resident ----------------
        tm_cap = max(8, ((budget - resident2) // per_row2) // 8 * 8)
        tm_eff = min(tm, tm_cap)
        if M <= tm_eff:
            block_m = M                       # block == full dim (no 8-row constraint)
        else:
            block_m = max(8, (tm_eff // 8) * 8)
        grid_m = pl.cdiv(M, block_m)          # ragged last block handled by Pallas

        in_specs = [
            pl.BlockSpec((block_m, K), lambda i: (i, 0)),     # x row tile (streamed)
            pl.BlockSpec((K, N), lambda i: (0, 0)),           # whole W (resident)
        ]
        operands = [x, w]
        if use_bias:
            in_specs.append(pl.BlockSpec((1, N), lambda i: (0, 0)))
            operands.append(b.reshape(1, N).astype(jnp.float32))
            kernel = _fc_kernel_bias
        else:
            kernel = _fc_kernel_nobias

        return pl.pallas_call(
            kernel,
            out_shape=jax.ShapeDtypeStruct((M, N), out_dtype),
            grid_spec=pltpu.PrefetchScalarGridSpec(
                num_scalar_prefetch=0,
                grid=(grid_m,),
                in_specs=in_specs,
                out_specs=pl.BlockSpec((block_m, N), lambda i: (i, 0)),
            ),
            compiler_params=pltpu.CompilerParams(
                dimension_semantics=("parallel",),
                vmem_limit_bytes=vmem_limit,
            ),
        )(*operands)

    # ---- fallback: K-tiled reduction grid (huge input_dim) -------------------
    # TODO(synk): also tile N (j axis) if both K and N are huge; N is kept resident
    #             here because autoencoder hidden dims are modest.
    tk = min(512, _round_up(K, 128))
    K_pad = _round_up(K, tk)
    if K_pad != K:
        # Zero-pad the reduction dim (zeros contribute nothing to the accumulation).
        x = jnp.pad(x, ((0, 0), (0, K_pad - K)))
        w = jnp.pad(w, ((0, K_pad - K), (0, 0)))
    grid_k = K_pad // tk

    w_tile2 = 2 * _round_up(tk, 8) * _round_up(N, 128) * op_bytes
    acc_row = _round_up(N, 128) * 4
    per_row2_kt = (2 * (_round_up(tk, 128) * op_bytes + _round_up(N, 128) * out_bytes)
                   + acc_row)
    tm_cap = max(8, ((budget - w_tile2 - 2 * b_bytes) // per_row2_kt) // 8 * 8)
    tm_eff = min(tm, tm_cap)
    if M <= tm_eff:
        block_m = M
    else:
        block_m = max(8, (tm_eff // 8) * 8)
    grid_m = pl.cdiv(M, block_m)

    in_specs = [
        pl.BlockSpec((block_m, tk), lambda i, k: (i, k)),
        pl.BlockSpec((tk, N), lambda i, k: (k, 0)),
    ]
    operands = [x, w]
    if use_bias:
        in_specs.append(pl.BlockSpec((1, N), lambda i, k: (0, 0)))
        operands.append(b.reshape(1, N).astype(jnp.float32))
        kernel = _fc_ktiled_kernel_bias
    else:
        kernel = _fc_ktiled_kernel_nobias

    return pl.pallas_call(
        kernel,
        out_shape=jax.ShapeDtypeStruct((M, N), out_dtype),
        grid_spec=pltpu.PrefetchScalarGridSpec(
            num_scalar_prefetch=0,
            grid=(grid_m, grid_k),
            in_specs=in_specs,
            out_specs=pl.BlockSpec((block_m, N), lambda i, k: (i, 0)),
            scratch_shapes=[pltpu.VMEM((block_m, N), jnp.float32)],
        ),
        compiler_params=pltpu.CompilerParams(
            dimension_semantics=("parallel", "arbitrary"),
            vmem_limit_bytes=vmem_limit,
        ),
    )(*operands)


class FullyConnectedPallas:
    """JAX/Pallas port of the PyTorch FullyConnected module (forward pass)."""

    def __init__(self, input_dim, output_dim, *, use_bias=False,
                 share_weights=False, key=None, compute_dtype=None):
        self.input_dim = input_dim
        self.output_dim = output_dim
        self.use_bias = use_bias
        self.share_weights = share_weights
        self.compute_dtype = compute_dtype
        key = key if key is not None else jax.random.PRNGKey(0)
        k_u, k_v, k_bu, k_bv = jax.random.split(key, 4)

        # Xavier (Glorot) uniform init, matching init.xavier_uniform_
        limit = math.sqrt(6.0 / (input_dim + output_dim))
        self.weights_u = jax.random.uniform(
            k_u, (input_dim, output_dim), jnp.float32, -limit, limit)
        self.weights_v = (self.weights_u if share_weights else
                          jax.random.uniform(k_v, (input_dim, output_dim),
                                             jnp.float32, -limit, limit))

        if use_bias:
            self.user_bias = 0.5 * jax.random.normal(k_bu, (output_dim,), jnp.float32)
            self.item_bias = (self.user_bias if share_weights else
                              0.5 * jax.random.normal(k_bv, (output_dim,), jnp.float32))
        else:
            self.user_bias = None
            self.item_bias = None

    def __call__(self, user_inputs, item_inputs):
        # Two independent pallas_calls: no host-side pad/stack of activations and
        # no post-kernel slicing (the kernel is HBM-bandwidth-bound).
        u = fc_forward_single(user_inputs, self.weights_u, self.user_bias,
                              use_bias=self.use_bias,
                              compute_dtype=self.compute_dtype)
        v = fc_forward_single(item_inputs, self.weights_v, self.item_bias,
                              use_bias=self.use_bias,
                              compute_dtype=self.compute_dtype)
        return u, v


if __name__ == "__main__":
    key = jax.random.PRNGKey(0)
    k_mod, k_u, k_v, k_x, k_w, k_b = jax.random.split(key, 6)

    num_users, num_items = 8, 12          # different row counts, not multiples of tile
    input_dim, output_dim = 32, 128

    user_inputs = jax.random.normal(k_u, (num_users, input_dim), jnp.float32)
    item_inputs = jax.random.normal(k_v, (num_items, input_dim), jnp.float32)

    # --- with bias, separate weights ------------------------------------------
    mod_b = FullyConnectedPallas(input_dim, output_dim,
                                 use_bias=True, share_weights=False, key=k_mod)
    u_out, v_out = jax.block_until_ready(mod_b(user_inputs, item_inputs))

    u_ref = jnp.maximum(user_inputs @ mod_b.weights_u, 0.0) + mod_b.user_bias
    v_ref = jnp.maximum(item_inputs @ mod_b.weights_v, 0.0) + mod_b.item_bias
    assert u_out.shape == (num_users, output_dim)
    assert v_out.shape == (num_items, output_dim)
    assert jnp.allclose(u_out, u_ref, atol=1e-5, rtol=1e-5)
    assert jnp.allclose(v_out, v_ref, atol=1e-5, rtol=1e-5)

    # --- no bias, shared weights -----------------------------------------------
    mod_nb = FullyConnectedPallas(input_dim, output_dim,
                                  use_bias=False, share_weights=True, key=k_mod)
    u2, v2 = jax.block_until_ready(mod_nb(user_inputs, item_inputs))
    assert jnp.allclose(u2, jnp.maximum(user_inputs @ mod_nb.weights_u, 0.0),
                        atol=1e-5, rtol=1e-5)
    assert jnp.allclose(v2, jnp.maximum(item_inputs @ mod_nb.weights_v, 0.0),
                        atol=1e-5, rtol=1e-5)

    # --- ragged row grid (M not a multiple of the row tile), fast path ---------
    M_r, K_r, N_r = 200, 32, 128
    x_r = jax.random.normal(k_x, (M_r, K_r), jnp.float32)
    w_r = 0.1 * jax.random.normal(k_w, (K_r, N_r), jnp.float32)
    b_r = jax.random.normal(k_b, (N_r,), jnp.float32)
    y_r = jax.block_until_ready(
        fc_forward_single(x_r, w_r, b_r, use_bias=True, tm=128))
    y_r_ref = jnp.maximum(x_r @ w_r, 0.0) + b_r
    assert y_r.shape == (M_r, N_r)
    assert jnp.allclose(y_r, y_r_ref, atol=1e-4, rtol=1e-4)

    # --- K-tiled fallback path (forced, exercises accumulator + K padding) -----
    M_k, K_k, N_k = 64, 640, 256
    x_k = 0.1 * jax.random.normal(k_x, (M_k, K_k), jnp.float32)
    w_k = 0.1 * jax.random.normal(k_w, (K_k, N_k), jnp.float32)
    y_k = jax.block_until_ready(
        fc_forward_single(x_k, w_k, None, use_bias=False, force_ktiled=True))
    y_k_ref = jnp.maximum(x_k @ w_k, 0.0)
    assert y_k.shape == (M_k, N_k)
    assert jnp.allclose(y_k, y_k_ref, atol=1e-2, rtol=1e-2)

    print("KERNEL_OK")
</pallas_src>

<mosaic_0001>
module attributes {stable_mosaic.version = 11 : i64} {
  func.func @_fc_kernel_bias(%arg0: i32, %arg1: memref<8x32xf32, #tpu.memory_space<vmem>>, %arg2: memref<32x128xf32, #tpu.memory_space<vmem>>, %arg3: memref<1x128xf32, #tpu.memory_space<vmem>>, %arg4: memref<8x128xf32, #tpu.memory_space<vmem>>) attributes {dimension_semantics = [#tpu.dimension_semantics<parallel>], iteration_bounds = array<i64: 1>, scalar_prefetch = 0 : i64, scratch_operands = 0 : i64, tpu.core_type = #tpu.core_type<tc>, window_params = [{transform_indices = @transform_0, window_bounds = array<i64: 8, 32>}, {pipeline_mode = #tpu.pipeline_mode<synchronous>, transform_indices = @transform_1, window_bounds = array<i64: 32, 128>}, {pipeline_mode = #tpu.pipeline_mode<synchronous>, transform_indices = @transform_2, window_bounds = array<i64: 1, 128>}, {transform_indices = @transform_3, window_bounds = array<i64: 8, 128>}]} {
    %c0 = arith.constant 0 : index
    %c0_0 = arith.constant 0 : index
    %0 = vector.load %arg1[%c0, %c0_0] : memref<8x32xf32, #tpu.memory_space<vmem>>, vector<8x32xf32>
    %c0_1 = arith.constant 0 : index
    %c0_2 = arith.constant 0 : index
    %1 = vector.load %arg2[%c0_1, %c0_2] : memref<32x128xf32, #tpu.memory_space<vmem>>, vector<32x128xf32>
    %cst = arith.constant dense<0.000000e+00> : vector<8x128xf32>
    %2 = tpu.matmul %0, %1, %cst {dimension_numbers = #tpu.dot_dimension_numbers<[1], [0], [0], [1], [0, 0, 1, 1], [], []>} : vector<8x32xf32>, vector<32x128xf32>, vector<8x128xf32> -> vector<8x128xf32>
    %cst_3 = arith.constant 0.000000e+00 : f32
    %3 = vector.broadcast %cst_3 : f32 to vector<8x128xf32>
    %4 = arith.maximumf %2, %3 : vector<8x128xf32>
    %c0_4 = arith.constant 0 : index
    %c0_5 = arith.constant 0 : index
    %5 = vector.load %arg3[%c0_4, %c0_5] : memref<1x128xf32, #tpu.memory_space<vmem>>, vector<1x128xf32>
    %6 = vector.broadcast %5 : vector<1x128xf32> to vector<8x128xf32>
    %7 = arith.addf %4, %6 : vector<8x128xf32>
    %c0_6 = arith.constant 0 : index
    %c0_7 = arith.constant 0 : index
    %8 = vector.load %arg4[%c0_6, %c0_7] : memref<8x128xf32, #tpu.memory_space<vmem>>, vector<8x128xf32>
    tpu.vector_store %arg4[%c0_6, %c0_7], %7 {strides = array<i32>} : memref<8x128xf32, #tpu.memory_space<vmem>>, vector<8x128xf32>,
    return
  }
  func.func @transform_0(%arg0: i32) -> (i32, i32) {
    %c0_i32 = arith.constant 0 : i32
    %c0_i32_0 = arith.constant 0 : i32
    return %arg0, %c0_i32 : i32, i32
  }
  func.func @transform_1(%arg0: i32) -> (i32, i32) {
    %c0_i32 = arith.constant 0 : i32
    %c0_i32_0 = arith.constant 0 : i32
    %c0_i32_1 = arith.constant 0 : i32
    return %c0_i32, %c0_i32_0 : i32, i32
  }
  func.func @transform_2(%arg0: i32) -> (i32, i32) {
    %c0_i32 = arith.constant 0 : i32
    %c0_i32_0 = arith.constant 0 : i32
    %c0_i32_1 = arith.constant 0 : i32
    return %c0_i32, %c0_i32_0 : i32, i32
  }
  func.func @transform_3(%arg0: i32) -> (i32, i32) {
    %c0_i32 = arith.constant 0 : i32
    %c0_i32_0 = arith.constant 0 : i32
    return %arg0, %c0_i32 : i32, i32
  }
}

</mosaic_0001>

<llo_original>
// kernel: tpu_custom_call.1
$region0: #{tpu_custom_call.1}
  #allocation0 [shape = 'u32[]', space=smem, size = 0x4, offset = 0x4, fixed_abs, tag = 'smem constant byte address 0x4 - core index']
  #allocation1 [shape = 'u32[144,128]{1,0:T(1,128)}', space=vmem, size = 0x12000, scoped, tag = 'internal scratch']
  %s0 = inlined_call_operand.hbm [shape: f32[8,32], index: 0, kind: input, shape index: {}]
  %s1 = inlined_call_operand.hbm [shape: f32[32,128], index: 1, kind: input, shape index: {}]
  %s2 = inlined_call_operand.vmem [shape: f32[1,128], index: 2, kind: input, shape index: {}]
  %s3 = inlined_call_operand.hbm [shape: f32[8,128], index: 3, kind: output, shape index: {}]
  %s4 = sld [smem:[#allocation0]]
  $region30: #{tpu_custom_call.1} parent=0
    _
  %s6 = ssub.s32 1, %s4
  %s7 = scalar_select 0, %s6, %s4
  $region1: #{tpu_custom_call.1} parent=0
    #allocation2 [shape = 'u8[4096]{0}', space=vmem, size = 0x1000, scoped, tag = 'input window, operand 0, single buffered']
    #allocation3 [shape = 's32[1]{0}', space=sflag, size = 0x4, scoped, tag = 'scoped memory for tpu_custom_call.1']
    #allocation4 [shape = 's32[1]{0}', space=sflag, size = 0x4, scoped, tag = 'scoped memory for tpu_custom_call.1']
    #allocation5 [shape = 'u8[16384]{0}', space=vmem, size = 0x4000, scoped, tag = 'input window, operand 1, single buffered']
    #allocation6 [shape = 's32[1]{0}', space=sflag, size = 0x4, scoped, tag = 'scoped memory for tpu_custom_call.1']
    #allocation7 [shape = 'u8[4096]{0}', space=vmem, size = 0x1000, scoped, tag = 'output window, operand 0, single buffered']
    %8 = vsyncpa [#allocation3], 0
    %9 = vsyncpa [#allocation6], 0
    %10 = vsyncpa [#allocation4], 0
    // Predicated region
    $region2: #{tpu_custom_call.1} parent=1 // pred_check
      _
    $region3: #{tpu_custom_call.1} parent=1 // pred_check_branch
      %12 = sbr.rel (0) target = $region5
    $region4: #{tpu_custom_call.1} parent=1 // pred_region
      %s14 = ssub.s32 128, 128
      %15 = vsyncadd [#allocation3], %s14
      %s17 = sshll.u32 [#allocation2], 4
      %s18 = int_to_ptr.vmem [resolvable:$true] %s17
      %20 = dma.hbm_to_vmem [thread:$0]  %s0, 128, %s18, [#allocation3]
    $region5: #{tpu_custom_call.1} parent=1 // pred_fallthru
      _
    // Predicated region
    $region6: #{tpu_custom_call.1} parent=1 // pred_check
      _
    $region7: #{tpu_custom_call.1} parent=1 // pred_check_branch
      %22 = sbr.rel (0) target = $region9
    $region8: #{tpu_custom_call.1} parent=1 // pred_region
      %s24 = ssub.s32 512, 512
      %25 = vsyncadd [#allocation6], %s24
      %s26 = sshll.u32 [#allocation5], 4
      %s27 = int_to_ptr.vmem [resolvable:$true] %s26
      %32 = dma.hbm_to_vmem [thread:$0]  %s1, 512, %s27, [#allocation6], 128, 128, 8
    $region9: #{tpu_custom_call.1} parent=1 // pred_fallthru
      _
    // Predicated region
    $region10: #{tpu_custom_call.1} parent=1 // pred_check
      _
    $region11: #{tpu_custom_call.1} parent=1 // pred_check_branch
      %34 = sbr.rel (0) target = $region13
    $region12: #{tpu_custom_call.1} parent=1 // pred_region
      _
    $region13: #{tpu_custom_call.1} parent=1 // pred_fallthru
      _
    // Predicated region
    $region14: #{tpu_custom_call.1} parent=1 // pred_check
      _
    $region15: #{tpu_custom_call.1} parent=1 // pred_check_branch
      %36 = sbr.rel (0) target = $region17
    $region16: #{tpu_custom_call.1} parent=1 // pred_region
      %37 = dma.done [#allocation3], 128
    $region17: #{tpu_custom_call.1} parent=1 // pred_fallthru
      _
    // Predicated region
    $region18: #{tpu_custom_call.1} parent=1 // pred_check
      _
    $region19: #{tpu_custom_call.1} parent=1 // pred_check_branch
      %39 = sbr.rel (0) target = $region21
    $region20: #{tpu_custom_call.1} parent=1 // pred_region
      %40 = dma.done [#allocation6], 512
    $region21: #{tpu_custom_call.1} parent=1 // pred_fallthru
      _
    %v41 = vld [vmem:[#allocation2] sm:$0xff]
    %v42 = vld [vmem:[#allocation5] sm:$0xff]
    %v43 = vld [vmem:[#allocation5 + $0x8] sm:$0xff]
    %v44 = vld [vmem:[#allocation5 + $0x10] sm:$0xff]
    %v45 = vld [vmem:[#allocation5 + $0x18] sm:$0xff]
    %vm46 = vcmask 261120
    %v48 = vsel %vm46, %v41, 0
    %50 = vmatprep.subr.mxu0 0.0
    %51 = vmatpush1.msra.mxu0 %v42
    %52 = vmatprep.subr.mxu0 0.0
    %53 = vmatpush1.msra.mxu0 %v43
    %54 = vmatprep.subr.mxu0 0.0
    %55 = vmatpush1.msra.mxu0 %v44
    %56 = vmatprep.subr.mxu0 0.0
    %57 = vmatpush1.msra.mxu0 %v45
    %58 = vmatprep.subr.mxu0 0.0
    %59 = vmatpush1.msra.mxu0 0.0
    %60 = vmatprep.subr.mxu0 0.0
    %61 = vmatpush1.msra.mxu0 0.0
    %62 = vmatprep.subr.mxu0 0.0
    %63 = vmatpush1.msra.mxu0 0.0
    %64 = vmatprep.subr.mxu0 0.0
    %65 = vmatpush1.msra.mxu0 0.0
    %66 = vmatprep.subr.mxu0 0.0
    %67 = vmatpush1.msra.mxu0 0.0
    %68 = vmatprep.subr.mxu0 0.0
    %69 = vmatpush1.msra.mxu0 0.0
    %70 = vmatprep.subr.mxu0 0.0
    %71 = vmatpush1.msra.mxu0 0.0
    %72 = vmatprep.subr.mxu0 0.0
    %73 = vmatpush1.msra.mxu0 0.0
    %74 = vmatprep.subr.mxu0 0.0
    %75 = vmatpush1.msra.mxu0 0.0
    %76 = vmatprep.subr.mxu0 0.0
    %77 = vmatpush1.msra.mxu0 0.0
    %78 = vmatprep.subr.mxu0 0.0
    %79 = vmatpush1.msra.mxu0 0.0
    %80 = vmatprep.subr.mxu0 0.0
    %81 = vmatpush1.msra.mxu0 0.0
    %82 = vmatprep.subr.mxu0 0.0
    %83 = vmatpush1.msra.mxu0 0.0
    %84 = vmatprep.subr.mxu0 0.0
    %85 = vmatpush1.msra.mxu0 0.0
    %86 = vmatprep.subr.mxu0 0.0
    %87 = vmatpush1.msra.mxu0 0.0
    %88 = vmatprep.subr.mxu0 0.0
    %89 = vmatpush1.msra.mxu0 0.0
    %90 = vmatprep.subr.mxu0 0.0
    %91 = vmatpush1.msra.mxu0 0.0
    %92 = vmatprep.subr.mxu0 0.0
    %93 = vmatpush1.msra.mxu0 0.0
    %94 = vmatprep.subr.mxu0 0.0
    %95 = vmatpush1.msra.mxu0 0.0
    %96 = vmatprep.subr.mxu0 0.0
    %97 = vmatpush1.msra.mxu0 0.0
    %98 = vmatprep.subr.mxu0 0.0
    %99 = vmatpush1.msra.mxu0 0.0
    %100 = vmatprep.subr.mxu0 0.0
    %101 = vmatpush1.msra.mxu0 0.0
    %102 = vmatprep.subr.mxu0 0.0
    %103 = vmatpush1.msra.mxu0 0.0
    %104 = vmatprep.subr.mxu0 0.0
    %105 = vmatpush1.msra.mxu0 0.0
    %106 = vmatprep.subr.mxu0 0.0
    %107 = vmatpush1.msra.mxu0 0.0
    %108 = vmatprep.subr.mxu0 0.0
    %109 = vmatpush1.msra.mxu0 0.0
    %110 = vmatprep.subr.mxu0 0.0
    %111 = vmatpush1.msra.mxu0 0.0
    %112 = vmatprep.subr.mxu0 0.0
    %113 = vmatpush1.msra.mxu0 0.0
    %114 = vmatprep.mubr.f32.mxu0 0.0
    %115 = vmatmul.mubr.f32.gmra.mrb[0].mxu0 %v48
    %v116 = vpop.f32.mrb[0].mxu0
    %v117 = vadd.f32 0.0, %v116
    %v118 = vpop.f32.mrb[0].mxu0
    %119 = vdwg.mxu0
    %v120 = vmax.f32 %v117, 0.0
    %v121 = vld [vmem:[%s2] sm:$0x1]
    %v123 = vlaneseq
    %v124 = vshrl.u32 %v123, 7
    %v125 = vsub.s32 0, %v124
    %v126 = vrot.slane %v121, %v125
    %v128 = vadd.f32 %v120, %v126
    %129 = vst [vmem:[#allocation7] sm:$0xff] %v128
    // Predicated region
    $region22: #{tpu_custom_call.1} parent=1 // pred_check
      _
    $region23: #{tpu_custom_call.1} parent=1 // pred_check_branch
      %131 = sbr.rel (0) target = $region25
    $region24: #{tpu_custom_call.1} parent=1 // pred_region
      %s133 = ssub.s32 128, 128
      %134 = vsyncadd [#allocation4], %s133
      %s136 = sshll.u32 [#allocation7], 4
      %s137 = int_to_ptr.vmem [resolvable:$true] %s136
      %139 = dma.vmem_to_hbm [thread:$0]  %s137, 128, %s3, [#allocation4]
    $region25: #{tpu_custom_call.1} parent=1 // pred_fallthru
      _
    // Predicated region
    $region26: #{tpu_custom_call.1} parent=1 // pred_check
      _
    $region27: #{tpu_custom_call.1} parent=1 // pred_check_branch
      %141 = sbr.rel (0) target = $region29
    $region28: #{tpu_custom_call.1} parent=1 // pred_region
      %142 = dma.done [#allocation4], 128
    $region29: #{tpu_custom_call.1} parent=1 // pred_fallthru
      _
    %143 = vsyncpa [#allocation3], 1
    %144 = vsyncpa [#allocation6], 1
    %145 = vsyncpa [#allocation4], 1

</llo_original>
